<compile_context>
chip_gen: v5e
topology: v5e:2x2
jax: 0.10.0
libtpu: 0.0.40
codegen_flags: <defaults>
</compile_context>

<pallas_src>
import jax
import jax.numpy as jnp
from jax.experimental import pallas as pl
from jax.experimental.pallas import tpu as pltpu


# --------------------------------------------------------------------------- #
# Kernel
# --------------------------------------------------------------------------- #
def resblock_kernel(x_ref, w1_ref, t1_ref, w2_ref, t2_ref, out_ref):
    """x_ref: (B, L, C) f32; w*: (3, C, C) compute dtype; t*: (1, C) f32."""
    cdt = w1_ref.dtype
    B, L, C = x_ref.shape
    M = B * L

    x = x_ref[...]                       # single HBM->VMEM read per step
    xc = x.astype(cdt)                   # GEMM LHS dtype; residual stays f32

    def conv(a3, w_ref, t_ref):
        # k=3, pad=1 Conv1d as three K=C MXU GEMMs over tap-shifted views.
        # Taps are built in-register with a zero halo (no VMEM scratch, no
        # scatter stores).  Tap 0 pairs with row l-1, tap 2 with row l+1.
        if L > 1:
            zero = jnp.zeros((B, 1, C), a3.dtype)
            prev = jnp.concatenate([zero, a3[:, : L - 1, :]], axis=1)
            nxt = jnp.concatenate([a3[:, 1:, :], zero], axis=1)
        else:
            prev = jnp.zeros_like(a3)
            nxt = jnp.zeros_like(a3)
        acc = jnp.dot(prev.reshape(M, C), w_ref[0],
                      preferred_element_type=jnp.float32)
        acc += jnp.dot(a3.reshape(M, C), w_ref[1],
                       preferred_element_type=jnp.float32)
        acc += jnp.dot(nxt.reshape(M, C), w_ref[2],
                       preferred_element_type=jnp.float32)
        return acc + t_ref[...]          # (M, C) f32 + (1, C) folded BN shift

    # conv1 + bn1 + ReLU (f32)
    h = jnp.maximum(conv(xc, w1_ref, t1_ref), 0.0)
    # conv2 + bn2 (f32 accumulation, compute-dtype GEMM inputs)
    g = conv(h.astype(cdt).reshape(B, L, C), w2_ref, t2_ref)
    # residual add + final ReLU in f32
    out_ref[...] = jnp.maximum(g.reshape(B, L, C) + x, 0.0).astype(out_ref.dtype)


# --------------------------------------------------------------------------- #
# Wrapper
# --------------------------------------------------------------------------- #
def _vmem_capacity_bytes():
    try:
        return int(pltpu.get_tpu_info().vmem_capacity_bytes)
    except Exception:
        return 64 * 1024 * 1024          # conservative: v7x per-TensorCore


def _tensorcores_per_chip():
    try:
        dev = jax.devices()[0]
        kind = str(getattr(dev, "device_kind", "")).lower()
        if "v7" in kind or "7x" in kind:
            return 2
        nc = getattr(dev, "num_cores", None)
        if nc:
            return int(nc)
    except Exception:
        pass
    return 1


def resblock_forward(x_ncl, params, eps=1e-5, compute_dtype=jnp.bfloat16):
    """x_ncl: (N, C, L) float32, PyTorch Conv1d layout. Eval-mode BN semantics."""
    N, C, L = x_ncl.shape
    x_nlc = jnp.transpose(x_ncl, (0, 2, 1)).astype(jnp.float32)   # (N, L, C)

    # ---- fold conv bias + eval-mode BN into weights and per-channel shifts ----
    s1 = params["bn1_gamma"] / jnp.sqrt(params["bn1_var"] + eps)
    t1 = params["bn1_beta"] + (params["conv1_b"] - params["bn1_mean"]) * s1
    s2 = params["bn2_gamma"] / jnp.sqrt(params["bn2_var"] + eps)
    t2 = params["bn2_beta"] + (params["conv2_b"] - params["bn2_mean"]) * s2

    def fold_w(w, s):
        # PyTorch (out, in, k) -> (k, in, out); scale output channels by BN.
        return (jnp.transpose(w, (2, 1, 0)) * s[None, None, :]).astype(compute_dtype)

    w1 = fold_w(params["conv1_w"], s1)                 # (3, C, C)
    w2 = fold_w(params["conv2_w"], s2)                 # (3, C, C)
    t1 = t1[None, :].astype(jnp.float32)               # (1, C)
    t2 = t2[None, :].astype(jnp.float32)

    # ---- generation-aware VMEM budget & batch tiling ----
    cdb = jnp.dtype(compute_dtype).itemsize
    capacity = _vmem_capacity_bytes()
    usable = max(min(capacity - 16 * 1024 * 1024, 100 * 1024 * 1024),
                 16 * 1024 * 1024)

    def est_bytes(bt):
        act = bt * L * C
        return (2 * act * 4                       # x block (double-buffered, f32)
                + 2 * act * 4                     # output block (double-buffered)
                + 12 * act * 4                    # in-kernel temporaries (taps, h, g)
                + 2 * 2 * (3 * C * C * cdb)       # w1, w2
                + 2 * 2 * (C * 4))                # t1, t2

    rows_target = 2048                            # GEMM rows (M) per grid step
    b_tile = max(1, min(N, max(1, rows_target // max(L, 1))))
    while b_tile > 1 and est_bytes(b_tile) > usable:
        b_tile = (b_tile + 1) // 2

    n_steps = -(-N // b_tile)
    # Only force >=2 grid steps on 2-TensorCore parts (v7x); on v5e/v6e a split
    # just adds per-step overhead.
    if _tensorcores_per_chip() >= 2 and N > 1 and n_steps < 2:
        b_tile = -(-N // 2)
        n_steps = -(-N // b_tile)

    Np = n_steps * b_tile
    x_in = jnp.pad(x_nlc, ((0, Np - N), (0, 0), (0, 0))) if Np != N else x_nlc

    w_spec = pl.BlockSpec((3, C, C), lambda n: (0, 0, 0))
    t_spec = pl.BlockSpec((1, C), lambda n: (0, 0))

    out_nlc = pl.pallas_call(
        resblock_kernel,
        out_shape=jax.ShapeDtypeStruct((Np, L, C), jnp.float32),
        grid=(n_steps,),
        in_specs=[
            pl.BlockSpec((b_tile, L, C), lambda n: (n, 0, 0)),   # activations (shared)
            w_spec, t_spec,                                      # conv1/bn1 folded
            w_spec, t_spec,                                      # conv2/bn2 folded
        ],
        out_specs=pl.BlockSpec((b_tile, L, C), lambda n: (n, 0, 0)),
        compiler_params=pltpu.CompilerParams(
            dimension_semantics=("parallel",),
            vmem_limit_bytes=int(usable)),
    )(x_in, w1, t1, w2, t2)

    return jnp.transpose(out_nlc[:N], (0, 2, 1))                 # back to NCL


# --------------------------------------------------------------------------- #
# Pure-JAX reference (lax.conv, eval-mode BN) for correctness check
# --------------------------------------------------------------------------- #
def _reference_forward(x_ncl, params, eps=1e-5):
    def conv1d(x, w, b):
        y = jax.lax.conv_general_dilated(
            x, w, window_strides=(1,), padding=((1, 1),),
            dimension_numbers=("NCH", "OIH", "NCH"))
        return y + b[None, :, None]

    def bn(x, g, bta, m, v):
        return (x - m[None, :, None]) / jnp.sqrt(v[None, :, None] + eps) \
            * g[None, :, None] + bta[None, :, None]

    h = jax.nn.relu(bn(conv1d(x_ncl, params["conv1_w"], params["conv1_b"]),
                       params["bn1_gamma"], params["bn1_beta"],
                       params["bn1_mean"], params["bn1_var"]))
    g = bn(conv1d(h, params["conv2_w"], params["conv2_b"]),
           params["bn2_gamma"], params["bn2_beta"],
           params["bn2_mean"], params["bn2_var"])
    return jax.nn.relu(g + x_ncl)


if __name__ == "__main__":
    N, C, L = 2, 4, 16
    key = jax.random.PRNGKey(0)
    keys = jax.random.split(key, 13)

    params = {
        "conv1_w": 0.1 * jax.random.normal(keys[0], (C, C, 3), jnp.float32),
        "conv1_b": 0.1 * jax.random.normal(keys[1], (C,), jnp.float32),
        "conv2_w": 0.1 * jax.random.normal(keys[2], (C, C, 3), jnp.float32),
        "conv2_b": 0.1 * jax.random.normal(keys[3], (C,), jnp.float32),
        "bn1_gamma": 1.0 + 0.1 * jax.random.normal(keys[4], (C,), jnp.float32),
        "bn1_beta": 0.1 * jax.random.normal(keys[5], (C,), jnp.float32),
        "bn1_mean": 0.1 * jax.random.normal(keys[6], (C,), jnp.float32),
        "bn1_var": 0.5 + jnp.abs(jax.random.normal(keys[7], (C,), jnp.float32)),
        "bn2_gamma": 1.0 + 0.1 * jax.random.normal(keys[8], (C,), jnp.float32),
        "bn2_beta": 0.1 * jax.random.normal(keys[9], (C,), jnp.float32),
        "bn2_mean": 0.1 * jax.random.normal(keys[10], (C,), jnp.float32),
        "bn2_var": 0.5 + jnp.abs(jax.random.normal(keys[11], (C,), jnp.float32)),
    }
    x = jax.random.normal(keys[12], (N, C, L), jnp.float32)

    ref = jax.block_until_ready(_reference_forward(x, params))

    # f32 matmul path — tight check against the XLA reference
    out_f32 = jax.block_until_ready(
        resblock_forward(x, params, compute_dtype=jnp.float32))
    assert out_f32.shape == (N, C, L)
    assert jnp.allclose(out_f32, ref, rtol=1e-4, atol=1e-4), \
        f"f32 max err {jnp.max(jnp.abs(out_f32 - ref))}"

    # bf16 matmul / f32 accumulate path (v6e/v7x MXU fast path) — looser tolerance
    out_bf16 = jax.block_until_ready(
        resblock_forward(x, params, compute_dtype=jnp.bfloat16))
    assert out_bf16.shape == (N, C, L)
    assert jnp.allclose(out_bf16, ref, rtol=2e-2, atol=2e-2), \
        f"bf16 max err {jnp.max(jnp.abs(out_bf16 - ref))}"

    print("KERNEL_OK")
</pallas_src>

<mosaic_0001>
module attributes {stable_mosaic.version = 11 : i64} {
  func.func @resblock_kernel(%arg0: i32, %arg1: memref<2x16x4xf32, #tpu.memory_space<vmem>>, %arg2: memref<3x4x4xf32, #tpu.memory_space<vmem>>, %arg3: memref<1x4xf32, #tpu.memory_space<vmem>>, %arg4: memref<3x4x4xf32, #tpu.memory_space<vmem>>, %arg5: memref<1x4xf32, #tpu.memory_space<vmem>>, %arg6: memref<2x16x4xf32, #tpu.memory_space<vmem>>) attributes {dimension_semantics = [#tpu.dimension_semantics<parallel>], iteration_bounds = array<i64: 1>, scalar_prefetch = 0 : i64, scratch_operands = 0 : i64, tpu.core_type = #tpu.core_type<tc>, window_params = [{transform_indices = @transform_0, window_bounds = array<i64: 2, 16, 4>}, {pipeline_mode = #tpu.pipeline_mode<synchronous>, transform_indices = @transform_1, window_bounds = array<i64: 3, 4, 4>}, {pipeline_mode = #tpu.pipeline_mode<synchronous>, transform_indices = @transform_2, window_bounds = array<i64: 1, 4>}, {pipeline_mode = #tpu.pipeline_mode<synchronous>, transform_indices = @transform_3, window_bounds = array<i64: 3, 4, 4>}, {pipeline_mode = #tpu.pipeline_mode<synchronous>, transform_indices = @transform_4, window_bounds = array<i64: 1, 4>}, {transform_indices = @transform_5, window_bounds = array<i64: 2, 16, 4>}]} {
    %c0 = arith.constant 0 : index
    %c0_0 = arith.constant 0 : index
    %c0_1 = arith.constant 0 : index
    %0 = vector.load %arg1[%c0, %c0_0, %c0_1] : memref<2x16x4xf32, #tpu.memory_space<vmem>>, vector<2x16x4xf32>
    %cst = arith.constant 0.000000e+00 : f32
    %1 = vector.broadcast %cst : f32 to vector<2x1x4xf32>
    %2 = vector.extract_strided_slice %0 {offsets = [0, 0, 0], sizes = [2, 15, 4], strides = [1, 1, 1]} : vector<2x16x4xf32> to vector<2x15x4xf32>
    %3 = tpu.concatenate %1, %2 in 1 : vector<2x1x4xf32>, vector<2x15x4xf32> -> vector<2x16x4xf32>
    %4 = vector.extract_strided_slice %0 {offsets = [0, 1, 0], sizes = [2, 15, 4], strides = [1, 1, 1]} : vector<2x16x4xf32> to vector<2x15x4xf32>
    %5 = tpu.concatenate %4, %1 in 1 : vector<2x15x4xf32>, vector<2x1x4xf32> -> vector<2x16x4xf32>
    %6 = vector.shape_cast %3 : vector<2x16x4xf32> to vector<32x4xf32>
    %c0_2 = arith.constant 0 : index
    %c0_3 = arith.constant 0 : index
    %c0_4 = arith.constant 0 : index
    %7 = vector.load %arg2[%c0_2, %c0_3, %c0_4] : memref<3x4x4xf32, #tpu.memory_space<vmem>>, vector<1x4x4xf32>
    %8 = vector.shape_cast %7 : vector<1x4x4xf32> to vector<4x4xf32>
    %cst_5 = arith.constant dense<0.000000e+00> : vector<32x4xf32>
    %9 = tpu.matmul %6, %8, %cst_5 {dimension_numbers = #tpu.dot_dimension_numbers<[1], [0], [0], [1], [0, 0, 1, 1], [], []>} : vector<32x4xf32>, vector<4x4xf32>, vector<32x4xf32> -> vector<32x4xf32>
    %10 = vector.shape_cast %0 : vector<2x16x4xf32> to vector<32x4xf32>
    %c1 = arith.constant 1 : index
    %c0_6 = arith.constant 0 : index
    %c0_7 = arith.constant 0 : index
    %11 = vector.load %arg2[%c1, %c0_6, %c0_7] : memref<3x4x4xf32, #tpu.memory_space<vmem>>, vector<1x4x4xf32>
    %12 = vector.shape_cast %11 : vector<1x4x4xf32> to vector<4x4xf32>
    %cst_8 = arith.constant dense<0.000000e+00> : vector<32x4xf32>
    %13 = tpu.matmul %10, %12, %cst_8 {dimension_numbers = #tpu.dot_dimension_numbers<[1], [0], [0], [1], [0, 0, 1, 1], [], []>} : vector<32x4xf32>, vector<4x4xf32>, vector<32x4xf32> -> vector<32x4xf32>
    %14 = arith.addf %9, %13 : vector<32x4xf32>
    %15 = vector.shape_cast %5 : vector<2x16x4xf32> to vector<32x4xf32>
    %c2 = arith.constant 2 : index
    %c0_9 = arith.constant 0 : index
    %c0_10 = arith.constant 0 : index
    %16 = vector.load %arg2[%c2, %c0_9, %c0_10] : memref<3x4x4xf32, #tpu.memory_space<vmem>>, vector<1x4x4xf32>
    %17 = vector.shape_cast %16 : vector<1x4x4xf32> to vector<4x4xf32>
    %cst_11 = arith.constant dense<0.000000e+00> : vector<32x4xf32>
    %18 = tpu.matmul %15, %17, %cst_11 {dimension_numbers = #tpu.dot_dimension_numbers<[1], [0], [0], [1], [0, 0, 1, 1], [], []>} : vector<32x4xf32>, vector<4x4xf32>, vector<32x4xf32> -> vector<32x4xf32>
    %19 = arith.addf %14, %18 : vector<32x4xf32>
    %c0_12 = arith.constant 0 : index
    %c0_13 = arith.constant 0 : index
    %20 = vector.load %arg3[%c0_12, %c0_13] : memref<1x4xf32, #tpu.memory_space<vmem>>, vector<1x4xf32>
    %21 = vector.broadcast %20 : vector<1x4xf32> to vector<32x4xf32>
    %22 = arith.addf %19, %21 : vector<32x4xf32>
    %cst_14 = arith.constant 0.000000e+00 : f32
    %23 = vector.broadcast %cst_14 : f32 to vector<32x4xf32>
    %24 = arith.maximumf %22, %23 : vector<32x4xf32>
    %25 = vector.shape_cast %24 : vector<32x4xf32> to vector<2x16x4xf32>
    %cst_15 = arith.constant 0.000000e+00 : f32
    %26 = vector.broadcast %cst_15 : f32 to vector<2x1x4xf32>
    %27 = vector.extract_strided_slice %25 {offsets = [0, 0, 0], sizes = [2, 15, 4], strides = [1, 1, 1]} : vector<2x16x4xf32> to vector<2x15x4xf32>
    %28 = tpu.concatenate %26, %27 in 1 : vector<2x1x4xf32>, vector<2x15x4xf32> -> vector<2x16x4xf32>
    %29 = vector.extract_strided_slice %25 {offsets = [0, 1, 0], sizes = [2, 15, 4], strides = [1, 1, 1]} : vector<2x16x4xf32> to vector<2x15x4xf32>
    %30 = tpu.concatenate %29, %26 in 1 : vector<2x15x4xf32>, vector<2x1x4xf32> -> vector<2x16x4xf32>
    %31 = vector.shape_cast %28 : vector<2x16x4xf32> to vector<32x4xf32>
    %c0_16 = arith.constant 0 : index
    %c0_17 = arith.constant 0 : index
    %c0_18 = arith.constant 0 : index
    %32 = vector.load %arg4[%c0_16, %c0_17, %c0_18] : memref<3x4x4xf32, #tpu.memory_space<vmem>>, vector<1x4x4xf32>
    %33 = vector.shape_cast %32 : vector<1x4x4xf32> to vector<4x4xf32>
    %cst_19 = arith.constant dense<0.000000e+00> : vector<32x4xf32>
    %34 = tpu.matmul %31, %33, %cst_19 {dimension_numbers = #tpu.dot_dimension_numbers<[1], [0], [0], [1], [0, 0, 1, 1], [], []>} : vector<32x4xf32>, vector<4x4xf32>, vector<32x4xf32> -> vector<32x4xf32>
    %35 = vector.shape_cast %25 : vector<2x16x4xf32> to vector<32x4xf32>
    %c1_20 = arith.constant 1 : index
    %c0_21 = arith.constant 0 : index
    %c0_22 = arith.constant 0 : index
    %36 = vector.load %arg4[%c1_20, %c0_21, %c0_22] : memref<3x4x4xf32, #tpu.memory_space<vmem>>, vector<1x4x4xf32>
    %37 = vector.shape_cast %36 : vector<1x4x4xf32> to vector<4x4xf32>
    %cst_23 = arith.constant dense<0.000000e+00> : vector<32x4xf32>
    %38 = tpu.matmul %35, %37, %cst_23 {dimension_numbers = #tpu.dot_dimension_numbers<[1], [0], [0], [1], [0, 0, 1, 1], [], []>} : vector<32x4xf32>, vector<4x4xf32>, vector<32x4xf32> -> vector<32x4xf32>
    %39 = arith.addf %34, %38 : vector<32x4xf32>
    %40 = vector.shape_cast %30 : vector<2x16x4xf32> to vector<32x4xf32>
    %c2_24 = arith.constant 2 : index
    %c0_25 = arith.constant 0 : index
    %c0_26 = arith.constant 0 : index
    %41 = vector.load %arg4[%c2_24, %c0_25, %c0_26] : memref<3x4x4xf32, #tpu.memory_space<vmem>>, vector<1x4x4xf32>
    %42 = vector.shape_cast %41 : vector<1x4x4xf32> to vector<4x4xf32>
    %cst_27 = arith.constant dense<0.000000e+00> : vector<32x4xf32>
    %43 = tpu.matmul %40, %42, %cst_27 {dimension_numbers = #tpu.dot_dimension_numbers<[1], [0], [0], [1], [0, 0, 1, 1], [], []>} : vector<32x4xf32>, vector<4x4xf32>, vector<32x4xf32> -> vector<32x4xf32>
    %44 = arith.addf %39, %43 : vector<32x4xf32>
    %c0_28 = arith.constant 0 : index
    %c0_29 = arith.constant 0 : index
    %45 = vector.load %arg5[%c0_28, %c0_29] : memref<1x4xf32, #tpu.memory_space<vmem>>, vector<1x4xf32>
    %46 = vector.broadcast %45 : vector<1x4xf32> to vector<32x4xf32>
    %47 = arith.addf %44, %46 : vector<32x4xf32>
    %48 = vector.shape_cast %47 : vector<32x4xf32> to vector<2x16x4xf32>
    %49 = arith.addf %48, %0 : vector<2x16x4xf32>
    %cst_30 = arith.constant 0.000000e+00 : f32
    %50 = vector.broadcast %cst_30 : f32 to vector<2x16x4xf32>
    %51 = arith.maximumf %49, %50 : vector<2x16x4xf32>
    %c0_31 = arith.constant 0 : index
    %c0_32 = arith.constant 0 : index
    %c0_33 = arith.constant 0 : index
    %52 = vector.load %arg6[%c0_31, %c0_32, %c0_33] : memref<2x16x4xf32, #tpu.memory_space<vmem>>, vector<2x16x4xf32>
    tpu.vector_store %arg6[%c0_31, %c0_32, %c0_33], %51 {strides = array<i32>} : memref<2x16x4xf32, #tpu.memory_space<vmem>>, vector<2x16x4xf32>,
    return
  }
  func.func @transform_0(%arg0: i32) -> (i32, i32, i32) {
    %c0_i32 = arith.constant 0 : i32
    %c0_i32_0 = arith.constant 0 : i32
    %c0_i32_1 = arith.constant 0 : i32
    return %arg0, %c0_i32, %c0_i32_0 : i32, i32, i32
  }
  func.func @transform_1(%arg0: i32) -> (i32, i32, i32) {
    %c0_i32 = arith.constant 0 : i32
    %c0_i32_0 = arith.constant 0 : i32
    %c0_i32_1 = arith.constant 0 : i32
    %c0_i32_2 = arith.constant 0 : i32
    return %c0_i32, %c0_i32_0, %c0_i32_1 : i32, i32, i32
  }
  func.func @transform_2(%arg0: i32) -> (i32, i32) {
    %c0_i32 = arith.constant 0 : i32
    %c0_i32_0 = arith.constant 0 : i32
    %c0_i32_1 = arith.constant 0 : i32
    return %c0_i32, %c0_i32_0 : i32, i32
  }
  func.func @transform_3(%arg0: i32) -> (i32, i32, i32) {
    %c0_i32 = arith.constant 0 : i32
    %c0_i32_0 = arith.constant 0 : i32
    %c0_i32_1 = arith.constant 0 : i32
    %c0_i32_2 = arith.constant 0 : i32
    return %c0_i32, %c0_i32_0, %c0_i32_1 : i32, i32, i32
  }
  func.func @transform_4(%arg0: i32) -> (i32, i32) {
    %c0_i32 = arith.constant 0 : i32
    %c0_i32_0 = arith.constant 0 : i32
    %c0_i32_1 = arith.constant 0 : i32
    return %c0_i32, %c0_i32_0 : i32, i32
  }
  func.func @transform_5(%arg0: i32) -> (i32, i32, i32) {
    %c0_i32 = arith.constant 0 : i32
    %c0_i32_0 = arith.constant 0 : i32
    %c0_i32_1 = arith.constant 0 : i32
    return %arg0, %c0_i32, %c0_i32_0 : i32, i32, i32
  }
}

</mosaic_0001>

<llo_original>
// kernel: tpu_custom_call.1
$region0: #{tpu_custom_call.1}
  #allocation0 [shape = 'u32[]', space=smem, size = 0x4, offset = 0x4, fixed_abs, tag = 'smem constant byte address 0x4 - core index']
  #allocation1 [shape = 'u32[72,128]{1,0:T(1,128)}', space=vmem, size = 0x9000, scoped, tag = 'internal scratch']
  %s0 = inlined_call_operand.vmem [shape: f32[2,16,4], index: 0, kind: input, shape index: {}]
  %s1 = inlined_call_operand.vmem [shape: f32[3,4,4], index: 1, kind: input, shape index: {}]
  %s2 = inlined_call_operand.vmem [shape: f32[1,4], index: 2, kind: input, shape index: {}]
  %s3 = inlined_call_operand.vmem [shape: f32[3,4,4], index: 3, kind: input, shape index: {}]
  %s4 = inlined_call_operand.vmem [shape: f32[1,4], index: 4, kind: input, shape index: {}]
  %s5 = inlined_call_operand.vmem [shape: f32[2,16,4], index: 5, kind: output, shape index: {}]
  %s6 = sld [smem:[#allocation0]]
  $region30: #{tpu_custom_call.1} parent=0
    _
  %s8 = ssub.s32 1, %s6
  %s9 = scalar_select 0, %s8, %s6
  // Predicated region
  $region2: #{tpu_custom_call.1} parent=0 // pred_check
    _
  $region3: #{tpu_custom_call.1} parent=0 // pred_check_branch
    %11 = sbr.rel (0) target = $region5
  $region4: #{tpu_custom_call.1} parent=0 // pred_region
    _
  $region5: #{tpu_custom_call.1} parent=0 // pred_fallthru
    _
  // Predicated region
  $region6: #{tpu_custom_call.1} parent=0 // pred_check
    _
  $region7: #{tpu_custom_call.1} parent=0 // pred_check_branch
    %13 = sbr.rel (0) target = $region9
  $region8: #{tpu_custom_call.1} parent=0 // pred_region
    _
  $region9: #{tpu_custom_call.1} parent=0 // pred_fallthru
    _
  // Predicated region
  $region10: #{tpu_custom_call.1} parent=0 // pred_check
    _
  $region11: #{tpu_custom_call.1} parent=0 // pred_check_branch
    %15 = sbr.rel (0) target = $region13
  $region12: #{tpu_custom_call.1} parent=0 // pred_region
    _
  $region13: #{tpu_custom_call.1} parent=0 // pred_fallthru
    _
  // Predicated region
  $region14: #{tpu_custom_call.1} parent=0 // pred_check
    _
  $region15: #{tpu_custom_call.1} parent=0 // pred_check_branch
    %17 = sbr.rel (0) target = $region17
  $region16: #{tpu_custom_call.1} parent=0 // pred_region
    _
  $region17: #{tpu_custom_call.1} parent=0 // pred_fallthru
    _
  // Predicated region
  $region18: #{tpu_custom_call.1} parent=0 // pred_check
    _
  $region19: #{tpu_custom_call.1} parent=0 // pred_check_branch
    %19 = sbr.rel (0) target = $region21
  $region20: #{tpu_custom_call.1} parent=0 // pred_region
    _
  $region21: #{tpu_custom_call.1} parent=0 // pred_fallthru
    _
  %v20 = vld [vmem:[%s0] sm:$0xff]
  %v21 = vld [vmem:[%s0 + $0x8] sm:$0xff]
  %v22 = vld [vmem:[%s0 + $0x10] sm:$0xff]
  %v23 = vld [vmem:[%s0 + $0x18] sm:$0xff]
  %vm28 = vcmask 1040384
  %v29 = vrot.slane %v20, 7
  %v30 = vrot.slane %v21, 7
  %v31 = vsel %vm28, %v29, %v30
  %v32 = vrot.slane %v22, 7
  %v33 = vrot.slane %v23, 7
  %v34 = vsel %vm28, %v32, %v33
  %v37 = vsel %vm28, 0.0, %v29
  %v38 = vsel %vm28, 0.0, %v32
  %vm39 = vcmask 1046528
  %v40 = vrot.slane %v20, 1
  %v41 = vrot.slane %v21, 1
  %v42 = vsel %vm39, %v40, %v41
  %v43 = vrot.slane %v22, 1
  %v44 = vrot.slane %v23, 1
  %v45 = vsel %vm39, %v43, %v44
  %v48 = vsel %vm39, %v41, 0.0
  %v49 = vsel %vm39, %v44, 0.0
  %v50 = vld [vmem:[%s1] sm:$0xf]
  %s51 = scalar_lea.vmem %s1, 4
  %v52 = vld [vmem:[%s51] sm:$0xf]
  %vm53 = vcmask 31744
  %v54 = vsel %vm53, %v20, 0
  %v56 = vsel %vm53, %v21, 0
  %v58 = vsel %vm53, %v22, 0
  %v60 = vsel %vm53, %v23, 0
  %vm62 = vcmask 1043456
  %v64 = vsel %vm62, %v52, 0
  %66 = vmatpush.msra.mxu0 0.0
  %67 = vmatpush.msra.mxu0 0.0
  %68 = vmatpush.msra.mxu0 0.0
  %69 = vmatpush.msra.mxu0 0.0
  %70 = vmatpush.msra.mxu0 0.0
  %71 = vmatpush.msra.mxu0 0.0
  %72 = vmatpush.msra.mxu0 0.0
  %73 = vmatpush.msra.mxu0 0.0
  %74 = vmatpush.msra.mxu0 0.0
  %75 = vmatpush.msra.mxu0 0.0
  %76 = vmatpush.msra.mxu0 0.0
  %77 = vmatpush.msra.mxu0 0.0
  %78 = vmatpush.msra.mxu0 0.0
  %79 = vmatpush.msra.mxu0 0.0
  %80 = vmatpush.msra.mxu0 0.0
  %81 = vmatpush.msra.mxu0 %v64
  %82 = vmatmul.f32.gmra.mxu0 %v54
  %v83 = vpop.f32.mrf.mxu0
  %v84 = vadd.f32 0.0, %v83
  %85 = vmatmul.f32.gmra.mxu0 %v56
  %v86 = vpop.f32.mrf.mxu0
  %v87 = vadd.f32 0.0, %v86
  %88 = vmatmul.f32.gmra.mxu0 %v58
  %v89 = vpop.f32.mrf.mxu0
  %v90 = vadd.f32 0.0, %v89
  %91 = vmatmul.f32.gmra.mxu0 %v60
  %v92 = vpop.f32.mrf.mxu0
  %v93 = vadd.f32 0.0, %v92
  %94 = vdwg.mxu0
  %v96 = vsel %vm53, %v37, 0
  %v98 = vsel %vm53, %v31, 0
  %v101 = vsel %vm53, %v38, 0
  %v103 = vsel %vm53, %v34, 0
  %v106 = vsel %vm62, %v50, 0
  %108 = vmatpush.msra.mxu0 0.0
  %109 = vmatpush.msra.mxu0 0.0
  %110 = vmatpush.msra.mxu0 0.0
  %111 = vmatpush.msra.mxu0 0.0
  %112 = vmatpush.msra.mxu0 0.0
  %113 = vmatpush.msra.mxu0 0.0
  %114 = vmatpush.msra.mxu0 0.0
  %115 = vmatpush.msra.mxu0 0.0
  %116 = vmatpush.msra.mxu0 0.0
  %117 = vmatpush.msra.mxu0 0.0
  %118 = vmatpush.msra.mxu0 0.0
  %119 = vmatpush.msra.mxu0 0.0
  %120 = vmatpush.msra.mxu0 0.0
  %121 = vmatpush.msra.mxu0 0.0
  %122 = vmatpush.msra.mxu0 0.0
  %123 = vmatpush.msra.mxu0 %v106
  %124 = vmatmul.f32.gmra.mxu0 %v96
  %v125 = vpop.f32.mrf.mxu0
  %v126 = vadd.f32 %v84, %v125
  %127 = vmatmul.f32.gmra.mxu0 %v98
  %v128 = vpop.f32.mrf.mxu0
  %v129 = vadd.f32 %v87, %v128
  %130 = vmatmul.f32.gmra.mxu0 %v101
  %v131 = vpop.f32.mrf.mxu0
  %v132 = vadd.f32 %v90, %v131
  %133 = vmatmul.f32.gmra.mxu0 %v103
  %v134 = vpop.f32.mrf.mxu0
  %v135 = vadd.f32 %v93, %v134
  %136 = vdwg.mxu0
  %s137 = scalar_lea.vmem %s1, 8
  %v138 = vld [vmem:[%s137] sm:$0xf]
  %v139 = vsel %vm53, %v42, 0
  %v142 = vsel %vm53, %v48, 0
  %v144 = vsel %vm53, %v45, 0
  %v147 = vsel %vm53, %v49, 0
  %v150 = vsel %vm62, %v138, 0
  %152 = vmatpush.msra.mxu0 0.0
  %153 = vmatpush.msra.mxu0 0.0
  %154 = vmatpush.msra.mxu0 0.0
  %155 = vmatpush.msra.mxu0 0.0
  %156 = vmatpush.msra.mxu0 0.0
  %157 = vmatpush.msra.mxu0 0.0
  %158 = vmatpush.msra.mxu0 0.0
  %159 = vmatpush.msra.mxu0 0.0
  %160 = vmatpush.msra.mxu0 0.0
  %161 = vmatpush.msra.mxu0 0.0
  %162 = vmatpush.msra.mxu0 0.0
  %163 = vmatpush.msra.mxu0 0.0
  %164 = vmatpush.msra.mxu0 0.0
  %165 = vmatpush.msra.mxu0 0.0
  %166 = vmatpush.msra.mxu0 0.0
  %167 = vmatpush.msra.mxu0 %v150
  %168 = vmatmul.f32.gmra.mxu0 %v139
  %v169 = vpop.f32.mrf.mxu0
  %v170 = vadd.f32 0.0, %v169
  %171 = vmatmul.f32.gmra.mxu0 %v142
  %v172 = vpop.f32.mrf.mxu0
  %v173 = vadd.f32 0.0, %v172
  %174 = vmatmul.f32.gmra.mxu0 %v144
  %v175 = vpop.f32.mrf.mxu0
  %v176 = vadd.f32 0.0, %v175
  %177 = vmatmul.f32.gmra.mxu0 %v147
  %v178 = vpop.f32.mrf.mxu0
  %v179 = vadd.f32 0.0, %v178
  %180 = vdwg.mxu0
  %v181 = vadd.f32 %v126, %v170
  %v182 = vadd.f32 %v129, %v173
  %v183 = vadd.f32 %v132, %v176
  %v184 = vadd.f32 %v135, %v179
  %v185 = vld [vmem:[%s2] sm:$0x1]
  %v187 = vperm.slane %v185, 0
  %v189 = vadd.f32 %v181, %v187
  %v190 = vadd.f32 %v182, %v187
  %v191 = vadd.f32 %v183, %v187
  %v192 = vadd.f32 %v184, %v187
  %v193 = vmax.f32 %v189, 0.0
  %v194 = vmax.f32 %v190, 0.0
  %v195 = vmax.f32 %v191, 0.0
  %v196 = vmax.f32 %v192, 0.0
  %v201 = vrot.slane %v193, 7
  %v202 = vrot.slane %v194, 7
  %v203 = vsel %vm28, %v201, %v202
  %v204 = vrot.slane %v195, 7
  %v205 = vrot.slane %v196, 7
  %v206 = vsel %vm28, %v204, %v205
  %v209 = vsel %vm28, 0.0, %v201
  %v210 = vsel %vm28, 0.0, %v204
  %v211 = vrot.slane %v193, 1
  %v212 = vrot.slane %v194, 1
  %v213 = vsel %vm39, %v211, %v212
  %v214 = vrot.slane %v195, 1
  %v215 = vrot.slane %v196, 1
  %v216 = vsel %vm39, %v214, %v215
  %v219 = vsel %vm39, %v212, 0.0
  %v220 = vsel %vm39, %v215, 0.0
  %v221 = vld [vmem:[%s3] sm:$0xf]
  %s222 = scalar_lea.vmem %s3, 4
  %v223 = vld [vmem:[%s222] sm:$0xf]
  %v224 = vsel %vm53, %v193, 0
  %v226 = vsel %vm53, %v194, 0
  %v228 = vsel %vm53, %v195, 0
  %v230 = vsel %vm53, %v196, 0
  %v233 = vsel %vm62, %v223, 0
  %235 = vmatpush.msra.mxu0 0.0
  %236 = vmatpush.msra.mxu0 0.0
  %237 = vmatpush.msra.mxu0 0.0
  %238 = vmatpush.msra.mxu0 0.0
  %239 = vmatpush.msra.mxu0 0.0
  %240 = vmatpush.msra.mxu0 0.0
  %241 = vmatpush.msra.mxu0 0.0
  %242 = vmatpush.msra.mxu0 0.0
  %243 = vmatpush.msra.mxu0 0.0
  %244 = vmatpush.msra.mxu0 0.0
  %245 = vmatpush.msra.mxu0 0.0
  %246 = vmatpush.msra.mxu0 0.0
  %247 = vmatpush.msra.mxu0 0.0
  %248 = vmatpush.msra.mxu0 0.0
  %249 = vmatpush.msra.mxu0 0.0
  %250 = vmatpush.msra.mxu0 %v233
  %251 = vmatmul.f32.gmra.mxu0 %v224
  %v252 = vpop.f32.mrf.mxu0
  %v253 = vadd.f32 0.0, %v252
  %254 = vmatmul.f32.gmra.mxu0 %v226
  %v255 = vpop.f32.mrf.mxu0
  %v256 = vadd.f32 0.0, %v255
  %257 = vmatmul.f32.gmra.mxu0 %v228
  %v258 = vpop.f32.mrf.mxu0
  %v259 = vadd.f32 0.0, %v258
  %260 = vmatmul.f32.gmra.mxu0 %v230
  %v261 = vpop.f32.mrf.mxu0
  %v262 = vadd.f32 0.0, %v261
  %263 = vdwg.mxu0
  %v265 = vsel %vm53, %v209, 0
  %v267 = vsel %vm53, %v203, 0
  %v270 = vsel %vm53, %v210, 0
  %v272 = vsel %vm53, %v206, 0
  %v275 = vsel %vm62, %v221, 0
  %277 = vmatpush.msra.mxu0 0.0
  %278 = vmatpush.msra.mxu0 0.0
  %279 = vmatpush.msra.mxu0 0.0
  %280 = vmatpush.msra.mxu0 0.0
  %281 = vmatpush.msra.mxu0 0.0
  %282 = vmatpush.msra.mxu0 0.0
  %283 = vmatpush.msra.mxu0 0.0
  %284 = vmatpush.msra.mxu0 0.0
  %285 = vmatpush.msra.mxu0 0.0
  %286 = vmatpush.msra.mxu0 0.0
  %287 = vmatpush.msra.mxu0 0.0
  %288 = vmatpush.msra.mxu0 0.0
  %289 = vmatpush.msra.mxu0 0.0
  %290 = vmatpush.msra.mxu0 0.0
  %291 = vmatpush.msra.mxu0 0.0
  %292 = vmatpush.msra.mxu0 %v275
  %293 = vmatmul.f32.gmra.mxu0 %v265
  %v294 = vpop.f32.mrf.mxu0
  %v295 = vadd.f32 %v253, %v294
  %296 = vmatmul.f32.gmra.mxu0 %v267
  %v297 = vpop.f32.mrf.mxu0
  %v298 = vadd.f32 %v256, %v297
  %299 = vmatmul.f32.gmra.mxu0 %v270
  %v300 = vpop.f32.mrf.mxu0
  %v301 = vadd.f32 %v259, %v300
  %302 = vmatmul.f32.gmra.mxu0 %v272
  %v303 = vpop.f32.mrf.mxu0
  %v304 = vadd.f32 %v262, %v303
  %305 = vdwg.mxu0
  %s306 = scalar_lea.vmem %s3, 8
  %v307 = vld [vmem:[%s306] sm:$0xf]
  %v308 = vsel %vm53, %v213, 0
  %v311 = vsel %vm53, %v219, 0
  %v313 = vsel %vm53, %v216, 0
  %v316 = vsel %vm53, %v220, 0
  %v319 = vsel %vm62, %v307, 0
  %321 = vmatpush.msra.mxu0 0.0
  %322 = vmatpush.msra.mxu0 0.0
  %323 = vmatpush.msra.mxu0 0.0
  %324 = vmatpush.msra.mxu0 0.0
  %325 = vmatpush.msra.mxu0 0.0
  %326 = vmatpush.msra.mxu0 0.0
  %327 = vmatpush.msra.mxu0 0.0
  %328 = vmatpush.msra.mxu0 0.0
  %329 = vmatpush.msra.mxu0 0.0
  %330 = vmatpush.msra.mxu0 0.0
  %331 = vmatpush.msra.mxu0 0.0
  %332 = vmatpush.msra.mxu0 0.0
  %333 = vmatpush.msra.mxu0 0.0
  %334 = vmatpush.msra.mxu0 0.0
  %335 = vmatpush.msra.mxu0 0.0
  %336 = vmatpush.msra.mxu0 %v319
  %337 = vmatmul.f32.gmra.mxu0 %v308
  %v338 = vpop.f32.mrf.mxu0
  %v339 = vadd.f32 0.0, %v338
  %340 = vmatmul.f32.gmra.mxu0 %v311
  %v341 = vpop.f32.mrf.mxu0
  %v342 = vadd.f32 0.0, %v341
  %343 = vmatmul.f32.gmra.mxu0 %v313
  %v344 = vpop.f32.mrf.mxu0
  %v345 = vadd.f32 0.0, %v344
  %346 = vmatmul.f32.gmra.mxu0 %v316
  %v347 = vpop.f32.mrf.mxu0
  %v348 = vadd.f32 0.0, %v347
  %349 = vdwg.mxu0
  %v350 = vadd.f32 %v295, %v339
  %v351 = vadd.f32 %v298, %v342
  %v352 = vadd.f32 %v301, %v345
  %v353 = vadd.f32 %v304, %v348
  %v354 = vld [vmem:[%s4] sm:$0x1]
  %v356 = vperm.slane %v354, 0
  %v358 = vadd.f32 %v350, %v356
  %v359 = vadd.f32 %v351, %v356
  %v360 = vadd.f32 %v352, %v356
  %v361 = vadd.f32 %v353, %v356
  %v362 = vadd.f32 %v358, %v20
  %v363 = vadd.f32 %v359, %v21
  %v364 = vadd.f32 %v360, %v22
  %v365 = vadd.f32 %v361, %v23
  %v366 = vmax.f32 %v362, 0.0
  %v367 = vmax.f32 %v363, 0.0
  %v368 = vmax.f32 %v364, 0.0
  %v369 = vmax.f32 %v365, 0.0
  %370 = vst.msk [vmem:[%s5] sm:$0xff] %vm53, %v366
  %371 = vst.msk [vmem:[%s5 + $0x8] sm:$0xff] %vm53, %v367
  %372 = vst.msk [vmem:[%s5 + $0x10] sm:$0xff] %vm53, %v368
  %373 = vst.msk [vmem:[%s5 + $0x18] sm:$0xff] %vm53, %v369
  // Predicated region
  $region22: #{tpu_custom_call.1} parent=0 // pred_check
    _
  $region23: #{tpu_custom_call.1} parent=0 // pred_check_branch
    %375 = sbr.rel (0) target = $region25
  $region24: #{tpu_custom_call.1} parent=0 // pred_region
    _
  $region25: #{tpu_custom_call.1} parent=0 // pred_fallthru
    _
  // Predicated region
  $region26: #{tpu_custom_call.1} parent=0 // pred_check
    _
  $region27: #{tpu_custom_call.1} parent=0 // pred_check_branch
    %377 = sbr.rel (0) target = $region29
  $region28: #{tpu_custom_call.1} parent=0 // pred_region
    _
  $region29: #{tpu_custom_call.1} parent=0 // pred_fallthru
    _

</llo_original>
